<compile_context>
chip_gen: v6e
topology: v6e:2x2x1
jax: 0.10.0
libtpu: 0.0.40
codegen_flags: <defaults>
</compile_context>

<pallas_src>
import jax
import jax.numpy as jnp
from jax.experimental import pallas as pl
from jax.experimental.pallas import tpu as pltpu

H1, H2 = 256, 128  # hidden widths of the MLP


def _round_up(x, m):
    return ((x + m - 1) // m) * m


def _cdiv(a, b):
    return -(-a // b)


def _actor_kernel(x_ref, w1_ref, b1_ref, w2_ref, b2_ref,
                  wh_ref, bh_ref, lo_ref, hi_ref, out_ref):
    x = x_ref[...]                                                     # [S, TM]

    # linear1 + ReLU (MXU matmul, f32 accumulate; bias/ReLU on the VPU)
    h1 = jnp.dot(w1_ref[...], x, preferred_element_type=jnp.float32)
    h1 = jnp.maximum(h1 + b1_ref[...], 0.0)                           # [256, TM]

    # linear2 + ReLU
    h2 = jnp.dot(w2_ref[...], h1, preferred_element_type=jnp.float32)
    h2 = jnp.maximum(h2 + b2_ref[...], 0.0)                           # [128, TM]

    # Fused heads: rows [0, A) = mean, [A, 2A) = log_std.  The clamp(-20, 2) on
    # the log_std rows is folded into precomputed per-row lo/hi vectors
    # (mean rows get -inf/+inf so they pass through unchanged).
    y = jnp.dot(wh_ref[...], h2, preferred_element_type=jnp.float32)
    y = jnp.minimum(jnp.maximum(y + bh_ref[...], lo_ref[...]), hi_ref[...])

    out_ref[...] = y.astype(out_ref.dtype)                            # [HP, TM]


def _choose_tile(batch):
    """Batch tile on the lane axis: single tile for tiny batches; otherwise a
    multiple of 128, giving >= 2 grid steps (v7x 2-TC split) and <= 1024 lanes
    (amortizes ~0.35 us/step overhead on single-TC v5e/v6e)."""
    if batch <= 256:
        return batch
    n_tiles = max(2, _cdiv(batch, 1024))
    return min(1024, _round_up(_cdiv(batch, n_tiles), 128))


@jax.jit
def actor_net_forward(state, params):
    """Pallas forward. state: [B, state_dim] f32. Returns (mean, log_std), each [B, A]."""
    B, S = state.shape
    A = params["wm"].shape[0]
    wh = params["w_heads"]
    HP = wh.shape[0]

    x_t = state.T                      # [S, B] feature-major (tiny relayout)

    TM = _choose_tile(B)
    grid = (_cdiv(B, TM),)

    flops = 2 * B * (S * H1 + H1 * H2 + H2 * HP)
    bytes_accessed = 4 * (B * S + S * H1 + H1 + H1 * H2 + H2
                          + H2 * HP + 3 * HP + B * HP)

    out = pl.pallas_call(
        _actor_kernel,
        out_shape=jax.ShapeDtypeStruct((HP, B), jnp.float32),
        grid=grid,
        in_specs=[
            pl.BlockSpec((S, TM), lambda i: (0, i)),      # x tile (streamed)
            pl.BlockSpec((H1, S), lambda i: (0, 0)),      # w1 (VMEM-resident)
            pl.BlockSpec((H1, 1), lambda i: (0, 0)),      # b1
            pl.BlockSpec((H2, H1), lambda i: (0, 0)),     # w2
            pl.BlockSpec((H2, 1), lambda i: (0, 0)),      # b2
            pl.BlockSpec((HP, H2), lambda i: (0, 0)),     # fused head weight
            pl.BlockSpec((HP, 1), lambda i: (0, 0)),      # fused head bias
            pl.BlockSpec((HP, 1), lambda i: (0, 0)),      # per-row clamp lo
            pl.BlockSpec((HP, 1), lambda i: (0, 0)),      # per-row clamp hi
        ],
        out_specs=pl.BlockSpec((HP, TM), lambda i: (0, i)),
        compiler_params=pltpu.CompilerParams(
            dimension_semantics=("parallel",),            # shard batch tiles across TCs
            vmem_limit_bytes=32 * 1024 * 1024,
        ),
        cost_estimate=pl.CostEstimate(
            flops=flops, transcendentals=0, bytes_accessed=bytes_accessed),
    )(x_t, params["w1"], params["b1"], params["w2"], params["b2"],
      wh, params["b_heads"], params["lo"], params["hi"])

    mean = out[:A, :].T                # [B, A]
    log_std = out[A:2 * A, :].T        # [B, A]
    return mean, log_std


def init_actor_params(key, state_dim, action_dim):
    """Matches nn.Linear's default U(-1/sqrt(fan_in)) init.  Weights are stored
    in PyTorch orientation [out, in]; biases as [out, 1] column vectors.  The
    fused head weight/bias and per-row clamp bounds are precomputed HERE (once),
    so the per-call wrapper does no weight assembly."""
    def linear(k, fan_in, fan_out):
        kw, kb = jax.random.split(k)
        bound = 1.0 / jnp.sqrt(fan_in)
        w = jax.random.uniform(kw, (fan_out, fan_in), jnp.float32, -bound, bound)
        b = jax.random.uniform(kb, (fan_out, 1), jnp.float32, -bound, bound)
        return w, b

    k1, k2, k3, k4 = jax.random.split(key, 4)
    w1, b1 = linear(k1, state_dim, H1)
    w2, b2 = linear(k2, H1, H2)
    wm, bm = linear(k3, H2, action_dim)
    ws, bs = linear(k4, H2, action_dim)

    A = action_dim
    HP = _round_up(2 * A, 8)           # fused head rows, padded to a sublane tile
    w_heads = jnp.zeros((HP, H2), jnp.float32)
    w_heads = w_heads.at[:A].set(wm).at[A:2 * A].set(ws)
    b_heads = jnp.zeros((HP, 1), jnp.float32)
    b_heads = b_heads.at[:A].set(bm).at[A:2 * A].set(bs)
    # clamp bounds: mean rows pass through (-inf, +inf); log_std rows -> [-20, 2]
    lo = jnp.full((HP, 1), -jnp.inf, jnp.float32).at[A:2 * A].set(-20.0)
    hi = jnp.full((HP, 1), jnp.inf, jnp.float32).at[A:2 * A].set(2.0)

    return {"w1": w1, "b1": b1, "w2": w2, "b2": b2,
            "wm": wm, "bm": bm, "ws": ws, "bs": bs,
            "w_heads": w_heads, "b_heads": b_heads, "lo": lo, "hi": hi}


def actor_net_forward_ref(state, params):
    """Pure-JAX reference (exact f32 matmuls) of the same forward pass."""
    hp = jax.lax.Precision.HIGHEST
    h1 = jnp.maximum(jnp.matmul(state, params["w1"].T, precision=hp) + params["b1"].T, 0.0)
    h2 = jnp.maximum(jnp.matmul(h1, params["w2"].T, precision=hp) + params["b2"].T, 0.0)
    mean = jnp.matmul(h2, params["wm"].T, precision=hp) + params["bm"].T
    log_std = jnp.clip(jnp.matmul(h2, params["ws"].T, precision=hp) + params["bs"].T,
                       -20.0, 2.0)
    return mean, log_std


def _check(state, params, action_dim):
    mean, log_std = actor_net_forward(state, params)
    jax.block_until_ready((mean, log_std))
    mean_ref, log_std_ref = actor_net_forward_ref(state, params)
    B = state.shape[0]
    assert mean.shape == (B, action_dim) and log_std.shape == (B, action_dim)
    # Tolerance covers possible bf16-pass MXU rounding in the default-precision
    # kernel matmuls (reference is exact f32); still catches any layout/weight
    # wiring error by orders of magnitude.
    assert jnp.allclose(mean, mean_ref, atol=2e-2, rtol=2e-2)
    assert jnp.allclose(log_std, log_std_ref, atol=2e-2, rtol=2e-2)
    assert bool(jnp.all(log_std <= 2.0)) and bool(jnp.all(log_std >= -20.0))


if __name__ == "__main__":
    key = jax.random.PRNGKey(0)
    k_param, k_state1, k_state2 = jax.random.split(key, 3)

    STATE_DIM, ACTION_DIM = 8, 4
    params = init_actor_params(k_param, STATE_DIM, ACTION_DIM)

    # Small case from the module spec (B=2): single tile, masked 2-lane store.
    state_small = jax.random.normal(k_state1, (2, STATE_DIM), jnp.float32)
    _check(state_small, params, ACTION_DIM)

    # Larger, awkward batch: 2-step grid (split across v7x's 2 TCs), ragged
    # last tile (no batch padding / extra HBM copy).
    state_big = jax.random.normal(k_state2, (1000, STATE_DIM), jnp.float32)
    _check(state_big, params, ACTION_DIM)

    print("KERNEL_OK")
</pallas_src>

<mosaic_0001>
module attributes {stable_mosaic.version = 11 : i64} {
  func.func @_actor_kernel(%arg0: i32, %arg1: memref<8x2xf32, #tpu.memory_space<vmem>>, %arg2: memref<256x8xf32, #tpu.memory_space<vmem>>, %arg3: memref<256x1xf32, #tpu.memory_space<vmem>>, %arg4: memref<128x256xf32, #tpu.memory_space<vmem>>, %arg5: memref<128x1xf32, #tpu.memory_space<vmem>>, %arg6: memref<8x128xf32, #tpu.memory_space<vmem>>, %arg7: memref<8x1xf32, #tpu.memory_space<vmem>>, %arg8: memref<8x1xf32, #tpu.memory_space<vmem>>, %arg9: memref<8x1xf32, #tpu.memory_space<vmem>>, %arg10: memref<8x2xf32, #tpu.memory_space<vmem>>) attributes {dimension_semantics = [#tpu.dimension_semantics<parallel>], iteration_bounds = array<i64: 1>, scalar_prefetch = 0 : i64, scratch_operands = 0 : i64, tpu.core_type = #tpu.core_type<tc>, window_params = [{transform_indices = @transform_0, window_bounds = array<i64: 8, 2>}, {pipeline_mode = #tpu.pipeline_mode<synchronous>, transform_indices = @transform_1, window_bounds = array<i64: 256, 8>}, {pipeline_mode = #tpu.pipeline_mode<synchronous>, transform_indices = @transform_2, window_bounds = array<i64: 256, 1>}, {pipeline_mode = #tpu.pipeline_mode<synchronous>, transform_indices = @transform_3, window_bounds = array<i64: 128, 256>}, {pipeline_mode = #tpu.pipeline_mode<synchronous>, transform_indices = @transform_4, window_bounds = array<i64: 128, 1>}, {pipeline_mode = #tpu.pipeline_mode<synchronous>, transform_indices = @transform_5, window_bounds = array<i64: 8, 128>}, {pipeline_mode = #tpu.pipeline_mode<synchronous>, transform_indices = @transform_6, window_bounds = array<i64: 8, 1>}, {pipeline_mode = #tpu.pipeline_mode<synchronous>, transform_indices = @transform_7, window_bounds = array<i64: 8, 1>}, {pipeline_mode = #tpu.pipeline_mode<synchronous>, transform_indices = @transform_8, window_bounds = array<i64: 8, 1>}, {transform_indices = @transform_9, window_bounds = array<i64: 8, 2>}]} {
    %c0 = arith.constant 0 : index
    %c0_0 = arith.constant 0 : index
    %0 = vector.load %arg1[%c0, %c0_0] : memref<8x2xf32, #tpu.memory_space<vmem>>, vector<8x2xf32>
    %c0_1 = arith.constant 0 : index
    %c0_2 = arith.constant 0 : index
    %1 = vector.load %arg2[%c0_1, %c0_2] : memref<256x8xf32, #tpu.memory_space<vmem>>, vector<256x8xf32>
    %cst = arith.constant dense<0.000000e+00> : vector<256x2xf32>
    %2 = tpu.matmul %1, %0, %cst {dimension_numbers = #tpu.dot_dimension_numbers<[1], [0], [0], [1], [0, 0, 1, 1], [], []>} : vector<256x8xf32>, vector<8x2xf32>, vector<256x2xf32> -> vector<256x2xf32>
    %c0_3 = arith.constant 0 : index
    %c0_4 = arith.constant 0 : index
    %3 = vector.load %arg3[%c0_3, %c0_4] : memref<256x1xf32, #tpu.memory_space<vmem>>, vector<256x1xf32>
    %4 = vector.broadcast %3 : vector<256x1xf32> to vector<256x2xf32>
    %5 = arith.addf %2, %4 : vector<256x2xf32>
    %cst_5 = arith.constant 0.000000e+00 : f32
    %6 = vector.broadcast %cst_5 : f32 to vector<256x2xf32>
    %7 = arith.maximumf %5, %6 : vector<256x2xf32>
    %c0_6 = arith.constant 0 : index
    %c0_7 = arith.constant 0 : index
    %8 = vector.load %arg4[%c0_6, %c0_7] : memref<128x256xf32, #tpu.memory_space<vmem>>, vector<128x256xf32>
    %cst_8 = arith.constant dense<0.000000e+00> : vector<128x2xf32>
    %9 = tpu.matmul %8, %7, %cst_8 {dimension_numbers = #tpu.dot_dimension_numbers<[1], [0], [0], [1], [0, 0, 1, 1], [], []>} : vector<128x256xf32>, vector<256x2xf32>, vector<128x2xf32> -> vector<128x2xf32>
    %c0_9 = arith.constant 0 : index
    %c0_10 = arith.constant 0 : index
    %10 = vector.load %arg5[%c0_9, %c0_10] : memref<128x1xf32, #tpu.memory_space<vmem>>, vector<128x1xf32>
    %11 = vector.broadcast %10 : vector<128x1xf32> to vector<128x2xf32>
    %12 = arith.addf %9, %11 : vector<128x2xf32>
    %cst_11 = arith.constant 0.000000e+00 : f32
    %13 = vector.broadcast %cst_11 : f32 to vector<128x2xf32>
    %14 = arith.maximumf %12, %13 : vector<128x2xf32>
    %c0_12 = arith.constant 0 : index
    %c0_13 = arith.constant 0 : index
    %15 = vector.load %arg6[%c0_12, %c0_13] : memref<8x128xf32, #tpu.memory_space<vmem>>, vector<8x128xf32>
    %cst_14 = arith.constant dense<0.000000e+00> : vector<8x2xf32>
    %16 = tpu.matmul %15, %14, %cst_14 {dimension_numbers = #tpu.dot_dimension_numbers<[1], [0], [0], [1], [0, 0, 1, 1], [], []>} : vector<8x128xf32>, vector<128x2xf32>, vector<8x2xf32> -> vector<8x2xf32>
    %c0_15 = arith.constant 0 : index
    %c0_16 = arith.constant 0 : index
    %17 = vector.load %arg7[%c0_15, %c0_16] : memref<8x1xf32, #tpu.memory_space<vmem>>, vector<8x1xf32>
    %18 = vector.broadcast %17 : vector<8x1xf32> to vector<8x2xf32>
    %19 = arith.addf %16, %18 : vector<8x2xf32>
    %c0_17 = arith.constant 0 : index
    %c0_18 = arith.constant 0 : index
    %20 = vector.load %arg8[%c0_17, %c0_18] : memref<8x1xf32, #tpu.memory_space<vmem>>, vector<8x1xf32>
    %21 = vector.broadcast %20 : vector<8x1xf32> to vector<8x2xf32>
    %22 = arith.maximumf %19, %21 : vector<8x2xf32>
    %c0_19 = arith.constant 0 : index
    %c0_20 = arith.constant 0 : index
    %23 = vector.load %arg9[%c0_19, %c0_20] : memref<8x1xf32, #tpu.memory_space<vmem>>, vector<8x1xf32>
    %24 = vector.broadcast %23 : vector<8x1xf32> to vector<8x2xf32>
    %25 = arith.minimumf %22, %24 : vector<8x2xf32>
    %c0_21 = arith.constant 0 : index
    %c0_22 = arith.constant 0 : index
    %26 = vector.load %arg10[%c0_21, %c0_22] : memref<8x2xf32, #tpu.memory_space<vmem>>, vector<8x2xf32>
    tpu.vector_store %arg10[%c0_21, %c0_22], %25 {strides = array<i32>} : memref<8x2xf32, #tpu.memory_space<vmem>>, vector<8x2xf32>,
    return
  }
  func.func @transform_0(%arg0: i32) -> (i32, i32) {
    %c0_i32 = arith.constant 0 : i32
    %c0_i32_0 = arith.constant 0 : i32
    return %c0_i32, %arg0 : i32, i32
  }
  func.func @transform_1(%arg0: i32) -> (i32, i32) {
    %c0_i32 = arith.constant 0 : i32
    %c0_i32_0 = arith.constant 0 : i32
    %c0_i32_1 = arith.constant 0 : i32
    return %c0_i32, %c0_i32_0 : i32, i32
  }
  func.func @transform_2(%arg0: i32) -> (i32, i32) {
    %c0_i32 = arith.constant 0 : i32
    %c0_i32_0 = arith.constant 0 : i32
    %c0_i32_1 = arith.constant 0 : i32
    return %c0_i32, %c0_i32_0 : i32, i32
  }
  func.func @transform_3(%arg0: i32) -> (i32, i32) {
    %c0_i32 = arith.constant 0 : i32
    %c0_i32_0 = arith.constant 0 : i32
    %c0_i32_1 = arith.constant 0 : i32
    return %c0_i32, %c0_i32_0 : i32, i32
  }
  func.func @transform_4(%arg0: i32) -> (i32, i32) {
    %c0_i32 = arith.constant 0 : i32
    %c0_i32_0 = arith.constant 0 : i32
    %c0_i32_1 = arith.constant 0 : i32
    return %c0_i32, %c0_i32_0 : i32, i32
  }
  func.func @transform_5(%arg0: i32) -> (i32, i32) {
    %c0_i32 = arith.constant 0 : i32
    %c0_i32_0 = arith.constant 0 : i32
    %c0_i32_1 = arith.constant 0 : i32
    return %c0_i32, %c0_i32_0 : i32, i32
  }
  func.func @transform_6(%arg0: i32) -> (i32, i32) {
    %c0_i32 = arith.constant 0 : i32
    %c0_i32_0 = arith.constant 0 : i32
    %c0_i32_1 = arith.constant 0 : i32
    return %c0_i32, %c0_i32_0 : i32, i32
  }
  func.func @transform_7(%arg0: i32) -> (i32, i32) {
    %c0_i32 = arith.constant 0 : i32
    %c0_i32_0 = arith.constant 0 : i32
    %c0_i32_1 = arith.constant 0 : i32
    return %c0_i32, %c0_i32_0 : i32, i32
  }
  func.func @transform_8(%arg0: i32) -> (i32, i32) {
    %c0_i32 = arith.constant 0 : i32
    %c0_i32_0 = arith.constant 0 : i32
    %c0_i32_1 = arith.constant 0 : i32
    return %c0_i32, %c0_i32_0 : i32, i32
  }
  func.func @transform_9(%arg0: i32) -> (i32, i32) {
    %c0_i32 = arith.constant 0 : i32
    %c0_i32_0 = arith.constant 0 : i32
    return %c0_i32, %arg0 : i32, i32
  }
}

</mosaic_0001>

<llo_original>
// kernel: actor_net_forward.1
$region0: #{actor_net_forward.1}
  #allocation0 [shape = 'u32[]', space=smem, size = 0x4, offset = 0x4, fixed_abs, tag = 'smem constant byte address 0x4 - core index']
  #allocation1 [shape = 'u32[144,128]{1,0:T(1,128)}', space=vmem, size = 0x12000, scoped, tag = 'internal scratch']
  %s0 = inlined_call_operand.vmem [shape: f32[8,2], index: 0, kind: input, shape index: {}]
  %s1 = inlined_call_operand.vmem [shape: f32[256,8], index: 1, kind: input, shape index: {}]
  %s2 = inlined_call_operand.vmem [shape: f32[256,1], index: 2, kind: input, shape index: {}]
  %s3 = inlined_call_operand.vmem [shape: f32[128,256], index: 3, kind: input, shape index: {}]
  %s4 = inlined_call_operand.vmem [shape: f32[128,1], index: 4, kind: input, shape index: {}]
  %s5 = inlined_call_operand.vmem [shape: f32[8,128], index: 5, kind: input, shape index: {}]
  %s6 = inlined_call_operand.vmem [shape: f32[8,1], index: 6, kind: input, shape index: {}]
  %s7 = inlined_call_operand.vmem [shape: f32[8,1], index: 7, kind: input, shape index: {}]
  %s8 = inlined_call_operand.vmem [shape: f32[8,1], index: 8, kind: input, shape index: {}]
  %s9 = inlined_call_operand.vmem [shape: f32[8,2], index: 9, kind: output, shape index: {}]
  %s10 = sld [smem:[#allocation0]]
  $region46: #{actor_net_forward.1} parent=0
    _
  %s12 = ssub.s32 1, %s10
  %s13 = scalar_select 0, %s12, %s10
  // Predicated region
  $region2: #{actor_net_forward.1} parent=0 // pred_check
    _
  $region3: #{actor_net_forward.1} parent=0 // pred_check_branch
    %15 = sbr.rel (0) target = $region5
  $region4: #{actor_net_forward.1} parent=0 // pred_region
    _
  $region5: #{actor_net_forward.1} parent=0 // pred_fallthru
    _
  // Predicated region
  $region6: #{actor_net_forward.1} parent=0 // pred_check
    _
  $region7: #{actor_net_forward.1} parent=0 // pred_check_branch
    %17 = sbr.rel (0) target = $region9
  $region8: #{actor_net_forward.1} parent=0 // pred_region
    _
  $region9: #{actor_net_forward.1} parent=0 // pred_fallthru
    _
  // Predicated region
  $region10: #{actor_net_forward.1} parent=0 // pred_check
    _
  $region11: #{actor_net_forward.1} parent=0 // pred_check_branch
    %19 = sbr.rel (0) target = $region13
  $region12: #{actor_net_forward.1} parent=0 // pred_region
    _
  $region13: #{actor_net_forward.1} parent=0 // pred_fallthru
    _
  // Predicated region
  $region14: #{actor_net_forward.1} parent=0 // pred_check
    _
  $region15: #{actor_net_forward.1} parent=0 // pred_check_branch
    %21 = sbr.rel (0) target = $region17
  $region16: #{actor_net_forward.1} parent=0 // pred_region
    _
  $region17: #{actor_net_forward.1} parent=0 // pred_fallthru
    _
  // Predicated region
  $region18: #{actor_net_forward.1} parent=0 // pred_check
    _
  $region19: #{actor_net_forward.1} parent=0 // pred_check_branch
    %23 = sbr.rel (0) target = $region21
  $region20: #{actor_net_forward.1} parent=0 // pred_region
    _
  $region21: #{actor_net_forward.1} parent=0 // pred_fallthru
    _
  // Predicated region
  $region22: #{actor_net_forward.1} parent=0 // pred_check
    _
  $region23: #{actor_net_forward.1} parent=0 // pred_check_branch
    %25 = sbr.rel (0) target = $region25
  $region24: #{actor_net_forward.1} parent=0 // pred_region
    _
  $region25: #{actor_net_forward.1} parent=0 // pred_fallthru
    _
  // Predicated region
  $region26: #{actor_net_forward.1} parent=0 // pred_check
    _
  $region27: #{actor_net_forward.1} parent=0 // pred_check_branch
    %27 = sbr.rel (0) target = $region29
  $region28: #{actor_net_forward.1} parent=0 // pred_region
    _
  $region29: #{actor_net_forward.1} parent=0 // pred_fallthru
    _
  // Predicated region
  $region30: #{actor_net_forward.1} parent=0 // pred_check
    _
  $region31: #{actor_net_forward.1} parent=0 // pred_check_branch
    %29 = sbr.rel (0) target = $region33
  $region32: #{actor_net_forward.1} parent=0 // pred_region
    _
  $region33: #{actor_net_forward.1} parent=0 // pred_fallthru
    _
  // Predicated region
  $region34: #{actor_net_forward.1} parent=0 // pred_check
    _
  $region35: #{actor_net_forward.1} parent=0 // pred_check_branch
    %31 = sbr.rel (0) target = $region37
  $region36: #{actor_net_forward.1} parent=0 // pred_region
    _
  $region37: #{actor_net_forward.1} parent=0 // pred_fallthru
    _
  %v32 = vld [vmem:[%s0] sm:$0xff]
  %v33 = vld [vmem:[%s1] sm:$0xff]
  %v34 = vld [vmem:[%s1 + $0x8] sm:$0xff]
  %v35 = vld [vmem:[%s1 + $0x10] sm:$0xff]
  %v36 = vld [vmem:[%s1 + $0x18] sm:$0xff]
  %v37 = vld [vmem:[%s1 + $0x20] sm:$0xff]
  %v38 = vld [vmem:[%s1 + $0x28] sm:$0xff]
  %v39 = vld [vmem:[%s1 + $0x30] sm:$0xff]
  %v40 = vld [vmem:[%s1 + $0x38] sm:$0xff]
  %v41 = vld [vmem:[%s1 + $0x40] sm:$0xff]
  %v42 = vld [vmem:[%s1 + $0x48] sm:$0xff]
  %v43 = vld [vmem:[%s1 + $0x50] sm:$0xff]
  %v44 = vld [vmem:[%s1 + $0x58] sm:$0xff]
  %v45 = vld [vmem:[%s1 + $0x60] sm:$0xff]
  %v46 = vld [vmem:[%s1 + $0x68] sm:$0xff]
  %v47 = vld [vmem:[%s1 + $0x70] sm:$0xff]
  %v48 = vld [vmem:[%s1 + $0x78] sm:$0xff]
  %v49 = vld [vmem:[%s1 + $0x80] sm:$0xff]
  %v50 = vld [vmem:[%s1 + $0x88] sm:$0xff]
  %v51 = vld [vmem:[%s1 + $0x90] sm:$0xff]
  %v52 = vld [vmem:[%s1 + $0x98] sm:$0xff]
  %v53 = vld [vmem:[%s1 + $0xa0] sm:$0xff]
  %v54 = vld [vmem:[%s1 + $0xa8] sm:$0xff]
  %v55 = vld [vmem:[%s1 + $0xb0] sm:$0xff]
  %v56 = vld [vmem:[%s1 + $0xb8] sm:$0xff]
  %v57 = vld [vmem:[%s1 + $0xc0] sm:$0xff]
  %v58 = vld [vmem:[%s1 + $0xc8] sm:$0xff]
  %v59 = vld [vmem:[%s1 + $0xd0] sm:$0xff]
  %v60 = vld [vmem:[%s1 + $0xd8] sm:$0xff]
  %v61 = vld [vmem:[%s1 + $0xe0] sm:$0xff]
  %v62 = vld [vmem:[%s1 + $0xe8] sm:$0xff]
  %v63 = vld [vmem:[%s1 + $0xf0] sm:$0xff]
  %v64 = vld [vmem:[%s1 + $0xf8] sm:$0xff]
  %v65 = vld [vmem:[%s2] sm:$0xff]
  %v66 = vld [vmem:[%s2 + $0x8] sm:$0xff]
  %v67 = vld [vmem:[%s2 + $0x10] sm:$0xff]
  %v68 = vld [vmem:[%s2 + $0x18] sm:$0xff]
  %v69 = vld [vmem:[%s2 + $0x20] sm:$0xff]
  %v70 = vld [vmem:[%s2 + $0x28] sm:$0xff]
  %v71 = vld [vmem:[%s2 + $0x30] sm:$0xff]
  %v72 = vld [vmem:[%s2 + $0x38] sm:$0xff]
  %v73 = vld [vmem:[%s2 + $0x40] sm:$0xff]
  %v74 = vld [vmem:[%s2 + $0x48] sm:$0xff]
  %v75 = vld [vmem:[%s2 + $0x50] sm:$0xff]
  %v76 = vld [vmem:[%s2 + $0x58] sm:$0xff]
  %v77 = vld [vmem:[%s2 + $0x60] sm:$0xff]
  %v78 = vld [vmem:[%s2 + $0x68] sm:$0xff]
  %v79 = vld [vmem:[%s2 + $0x70] sm:$0xff]
  %v80 = vld [vmem:[%s2 + $0x78] sm:$0xff]
  %v81 = vld [vmem:[%s2 + $0x80] sm:$0xff]
  %v82 = vld [vmem:[%s2 + $0x88] sm:$0xff]
  %v83 = vld [vmem:[%s2 + $0x90] sm:$0xff]
  %v84 = vld [vmem:[%s2 + $0x98] sm:$0xff]
  %v85 = vld [vmem:[%s2 + $0xa0] sm:$0xff]
  %v86 = vld [vmem:[%s2 + $0xa8] sm:$0xff]
  %v87 = vld [vmem:[%s2 + $0xb0] sm:$0xff]
  %v88 = vld [vmem:[%s2 + $0xb8] sm:$0xff]
  %v89 = vld [vmem:[%s2 + $0xc0] sm:$0xff]
  %v90 = vld [vmem:[%s2 + $0xc8] sm:$0xff]
  %v91 = vld [vmem:[%s2 + $0xd0] sm:$0xff]
  %v92 = vld [vmem:[%s2 + $0xd8] sm:$0xff]
  %v93 = vld [vmem:[%s2 + $0xe0] sm:$0xff]
  %v94 = vld [vmem:[%s2 + $0xe8] sm:$0xff]
  %v95 = vld [vmem:[%s2 + $0xf0] sm:$0xff]
  %v96 = vld [vmem:[%s2 + $0xf8] sm:$0xff]
  %98 = vset.pattern.permute.xlu0 0
  %99 = vperm.xlu0 %98, %v65
  %v100 = vpop.permute.xlu0 %99
  %103 = vset.pattern.permute.xlu0 0
  %104 = vperm.xlu0 %103, %v66
  %v105 = vpop.permute.xlu0 %104
  %108 = vset.pattern.permute.xlu0 0
  %109 = vperm.xlu0 %108, %v67
  %v110 = vpop.permute.xlu0 %109
  %113 = vset.pattern.permute.xlu0 0
  %114 = vperm.xlu0 %113, %v68
  %v115 = vpop.permute.xlu0 %114
  %118 = vset.pattern.permute.xlu0 0
  %119 = vperm.xlu0 %118, %v69
  %v120 = vpop.permute.xlu0 %119
  %123 = vset.pattern.permute.xlu0 0
  %124 = vperm.xlu0 %123, %v70
  %v125 = vpop.permute.xlu0 %124
  %128 = vset.pattern.permute.xlu0 0
  %129 = vperm.xlu0 %128, %v71
  %v130 = vpop.permute.xlu0 %129
  %133 = vset.pattern.permute.xlu0 0
  %134 = vperm.xlu0 %133, %v72
  %v135 = vpop.permute.xlu0 %134
  %138 = vset.pattern.permute.xlu0 0
  %139 = vperm.xlu0 %138, %v73
  %v140 = vpop.permute.xlu0 %139
  %143 = vset.pattern.permute.xlu0 0
  %144 = vperm.xlu0 %143, %v74
  %v145 = vpop.permute.xlu0 %144
  %148 = vset.pattern.permute.xlu0 0
  %149 = vperm.xlu0 %148, %v75
  %v150 = vpop.permute.xlu0 %149
  %153 = vset.pattern.permute.xlu0 0
  %154 = vperm.xlu0 %153, %v76
  %v155 = vpop.permute.xlu0 %154
  %158 = vset.pattern.permute.xlu0 0
  %159 = vperm.xlu0 %158, %v77
  %v160 = vpop.permute.xlu0 %159
  %163 = vset.pattern.permute.xlu0 0
  %164 = vperm.xlu0 %163, %v78
  %v165 = vpop.permute.xlu0 %164
  %168 = vset.pattern.permute.xlu0 0
  %169 = vperm.xlu0 %168, %v79
  %v170 = vpop.permute.xlu0 %169
  %173 = vset.pattern.permute.xlu0 0
  %174 = vperm.xlu0 %173, %v80
  %v175 = vpop.permute.xlu0 %174
  %178 = vset.pattern.permute.xlu0 0
  %179 = vperm.xlu0 %178, %v81
  %v180 = vpop.permute.xlu0 %179
  %183 = vset.pattern.permute.xlu0 0
  %184 = vperm.xlu0 %183, %v82
  %v185 = vpop.permute.xlu0 %184
  %188 = vset.pattern.permute.xlu0 0
  %189 = vperm.xlu0 %188, %v83
  %v190 = vpop.permute.xlu0 %189
  %193 = vset.pattern.permute.xlu0 0
  %194 = vperm.xlu0 %193, %v84
  %v195 = vpop.permute.xlu0 %194
  %198 = vset.pattern.permute.xlu0 0
  %199 = vperm.xlu0 %198, %v85
  %v200 = vpop.permute.xlu0 %199
  %203 = vset.pattern.permute.xlu0 0
  %204 = vperm.xlu0 %203, %v86
  %v205 = vpop.permute.xlu0 %204
  %208 = vset.pattern.permute.xlu0 0
  %209 = vperm.xlu0 %208, %v87
  %v210 = vpop.permute.xlu0 %209
  %213 = vset.pattern.permute.xlu0 0
  %214 = vperm.xlu0 %213, %v88
  %v215 = vpop.permute.xlu0 %214
  %218 = vset.pattern.permute.xlu0 0
  %219 = vperm.xlu0 %218, %v89
  %v220 = vpop.permute.xlu0 %219
  %223 = vset.pattern.permute.xlu0 0
  %224 = vperm.xlu0 %223, %v90
  %v225 = vpop.permute.xlu0 %224
  %228 = vset.pattern.permute.xlu0 0
  %229 = vperm.xlu0 %228, %v91
  %v230 = vpop.permute.xlu0 %229
  %233 = vset.pattern.permute.xlu0 0
  %234 = vperm.xlu0 %233, %v92
  %v235 = vpop.permute.xlu0 %234
  %238 = vset.pattern.permute.xlu0 0
  %239 = vperm.xlu0 %238, %v93
  %v240 = vpop.permute.xlu0 %239
  %243 = vset.pattern.permute.xlu0 0
  %244 = vperm.xlu0 %243, %v94
  %v245 = vpop.permute.xlu0 %244
  %248 = vset.pattern.permute.xlu0 0
  %249 = vperm.xlu0 %248, %v95
  %v250 = vpop.permute.xlu0 %249
  %253 = vset.pattern.permute.xlu0 0
  %254 = vperm.xlu0 %253, %v96
  %v255 = vpop.permute.xlu0 %254
  %vm257 = vcmask 64512
  %v259 = vsel %vm257, %v33, 0
  %v262 = vsel %vm257, %v34, 0
  %v265 = vsel %vm257, %v35, 0
  %v268 = vsel %vm257, %v36, 0
  %v271 = vsel %vm257, %v37, 0
  %v274 = vsel %vm257, %v38, 0
  %v277 = vsel %vm257, %v39, 0
  %v280 = vsel %vm257, %v40, 0
  %v283 = vsel %vm257, %v41, 0
  %v286 = vsel %vm257, %v42, 0
  %v289 = vsel %vm257, %v43, 0
  %v292 = vsel %vm257, %v44, 0
  %v295 = vsel %vm257, %v45, 0
  %v298 = vsel %vm257, %v46, 0
  %v301 = vsel %vm257, %v47, 0
  %v304 = vsel %vm257, %v48, 0
  %v307 = vsel %vm257, %v49, 0
  %v310 = vsel %vm257, %v50, 0
  %v313 = vsel %vm257, %v51, 0
  %v316 = vsel %vm257, %v52, 0
  %v319 = vsel %vm257, %v53, 0
  %v322 = vsel %vm257, %v54, 0
  %v325 = vsel %vm257, %v55, 0
  %v328 = vsel %vm257, %v56, 0
  %v331 = vsel %vm257, %v57, 0
  %v334 = vsel %vm257, %v58, 0
  %v337 = vsel %vm257, %v59, 0
  %v340 = vsel %vm257, %v60, 0
  %v343 = vsel %vm257, %v61, 0
  %v346 = vsel %vm257, %v62, 0
  %v349 = vsel %vm257, %v63, 0
  %v352 = vsel %vm257, %v64, 0
  %354 = vmatprep.subr.mxu0 0.0
  %355 = vmatpush1.msra.mxu0 0.0
  %356 = vmatprep.subr.mxu0 0.0
  %357 = vmatpush1.msra.mxu0 0.0
  %358 = vmatprep.subr.mxu0 0.0
  %359 = vmatpush1.msra.mxu0 0.0
  %360 = vmatprep.subr.mxu0 0.0
  %361 = vmatpush1.msra.mxu0 0.0
  %362 = vmatprep.subr.mxu0 0.0
  %363 = vmatpush1.msra.mxu0 0.0
  %364 = vmatprep.subr.mxu0 0.0
  %365 = vmatpush1.msra.mxu0 0.0
  %366 = vmatprep.subr.mxu0 0.0
  %367 = vmatpush1.msra.mxu0 0.0
  %368 = vmatprep.subr.mxu0 0.0
  %369 = vmatpush1.msra.mxu0 0.0
  %370 = vmatprep.subr.mxu0 0.0
  %371 = vmatpush1.msra.mxu0 0.0
  %372 = vmatprep.subr.mxu0 0.0
  %373 = vmatpush1.msra.mxu0 0.0
  %374 = vmatprep.subr.mxu0 0.0
  %375 = vmatpush1.msra.mxu0 0.0
  %376 = vmatprep.subr.mxu0 0.0
  %377 = vmatpush1.msra.mxu0 0.0
  %378 = vmatprep.subr.mxu0 0.0
  %379 = vmatpush1.msra.mxu0 0.0
  %380 = vmatprep.subr.mxu0 0.0
  %381 = vmatpush1.msra.mxu0 0.0
  %382 = vmatprep.subr.mxu0 0.0
  %383 = vmatpush1.msra.mxu0 0.0
  %384 = vmatprep.subr.mxu0 0.0
  %385 = vmatpush1.msra.mxu0 %v32
  %386 = vmatprep.subr.mxu0 0.0
  %387 = vmatpush2.msra.mxu0 0.0
  %388 = vmatprep.subr.mxu0 0.0
  %389 = vmatpush2.msra.mxu0 0.0
  %390 = vmatprep.subr.mxu0 0.0
  %391 = vmatpush2.msra.mxu0 0.0
  %392 = vmatprep.subr.mxu0 0.0
  %393 = vmatpush2.msra.mxu0 0.0
  %394 = vmatprep.subr.mxu0 0.0
  %395 = vmatpush2.msra.mxu0 0.0
  %396 = vmatprep.subr.mxu0 0.0
  %397 = vmatpush2.msra.mxu0 0.0
  %398 = vmatprep.subr.mxu0 0.0
  %399 = vmatpush2.msra.mxu0 0.0
  %400 = vmatprep.subr.mxu0 0.0
  %401 = vmatpush2.msra.mxu0 0.0
  %402 = vmatprep.subr.mxu0 0.0
  %403 = vmatpush2.msra.mxu0 0.0
  %404 = vmatprep.subr.mxu0 0.0
  %405 = vmatpush2.msra.mxu0 0.0
  %406 = vmatprep.subr.mxu0 0.0
  %407 = vmatpush2.msra.mxu0 0.0
  %408 = vmatprep.subr.mxu0 0.0
  %409 = vmatpush2.msra.mxu0 0.0
  %410 = vmatprep.subr.mxu0 0.0
  %411 = vmatpush2.msra.mxu0 0.0
  %412 = vmatprep.subr.mxu0 0.0
  %413 = vmatpush2.msra.mxu0 0.0
  %414 = vmatprep.subr.mxu0 0.0
  %415 = vmatpush2.msra.mxu0 0.0
  %416 = vmatprep.subr.mxu0 0.0
  %417 = vmatpush2.msra.mxu0 0.0
  %418 = vmatprep.mubr.f32.mxu0 0.0
  %419 = vmatmul.mubr.f32.gmra.mxu0 %v259
  %v420 = vpop.f32.mrf.mxu0
  %v421 = vadd.f32 %v100, %v420
  %v422 = vpop.f32.mrf.mxu0
  %423 = vmatprep.mubr.f32.mxu0 0.0
  %424 = vmatmul.mubr.f32.gmra.mxu0 %v262
  %v425 = vpop.f32.mrf.mxu0
  %v426 = vadd.f32 %v105, %v425
  %v427 = vpop.f32.mrf.mxu0
  %428 = vmatprep.mubr.f32.mxu0 0.0
  %429 = vmatmul.mubr.f32.gmra.mxu0 %v265
  %v430 = vpop.f32.mrf.mxu0
  %v431 = vadd.f32 %v110, %v430
  %v432 = vpop.f32.mrf.mxu0
  %433 = vmatprep.mubr.f32.mxu0 0.0
  %434 = vmatmul.mubr.f32.gmra.mxu0 %v268
  %v435 = vpop.f32.mrf.mxu0
  %v436 = vadd.f32 %v115, %v435
  %v437 = vpop.f32.mrf.mxu0
  %438 = vmatprep.mubr.f32.mxu0 0.0
  %439 = vmatmul.mubr.f32.gmra.mxu0 %v271
  %v440 = vpop.f32.mrf.mxu0
  %v441 = vadd.f32 %v120, %v440
  %v442 = vpop.f32.mrf.mxu0
  %443 = vmatprep.mubr.f32.mxu0 0.0
  %444 = vmatmul.mubr.f32.gmra.mxu0 %v274
  %v445 = vpop.f32.mrf.mxu0
  %v446 = vadd.f32 %v125, %v445
  %v447 = vpop.f32.mrf.mxu0
  %448 = vmatprep.mubr.f32.mxu0 0.0
  %449 = vmatmul.mubr.f32.gmra.mxu0 %v277
  %v450 = vpop.f32.mrf.mxu0
  %v451 = vadd.f32 %v130, %v450
  %v452 = vpop.f32.mrf.mxu0
  %453 = vmatprep.mubr.f32.mxu0 0.0
  %454 = vmatmul.mubr.f32.gmra.mxu0 %v280
  %v455 = vpop.f32.mrf.mxu0
  %v456 = vadd.f32 %v135, %v455
  %v457 = vpop.f32.mrf.mxu0
  %458 = vmatprep.mubr.f32.mxu0 0.0
  %459 = vmatmul.mubr.f32.gmra.mxu0 %v283
  %v460 = vpop.f32.mrf.mxu0
  %v461 = vadd.f32 %v140, %v460
  %v462 = vpop.f32.mrf.mxu0
  %463 = vmatprep.mubr.f32.mxu0 0.0
  %464 = vmatmul.mubr.f32.gmra.mxu0 %v286
  %v465 = vpop.f32.mrf.mxu0
  %v466 = vadd.f32 %v145, %v465
  %v467 = vpop.f32.mrf.mxu0
  %468 = vmatprep.mubr.f32.mxu0 0.0
  %469 = vmatmul.mubr.f32.gmra.mxu0 %v289
  %v470 = vpop.f32.mrf.mxu0
  %v471 = vadd.f32 %v150, %v470
  %v472 = vpop.f32.mrf.mxu0
  %473 = vmatprep.mubr.f32.mxu0 0.0
  %474 = vmatmul.mubr.f32.gmra.mxu0 %v292
  %v475 = vpop.f32.mrf.mxu0
  %v476 = vadd.f32 %v155, %v475
  %v477 = vpop.f32.mrf.mxu0
  %478 = vmatprep.mubr.f32.mxu0 0.0
  %479 = vmatmul.mubr.f32.gmra.mxu0 %v295
  %v480 = vpop.f32.mrf.mxu0
  %v481 = vadd.f32 %v160, %v480
  %v482 = vpop.f32.mrf.mxu0
  %483 = vmatprep.mubr.f32.mxu0 0.0
  %484 = vmatmul.mubr.f32.gmra.mxu0 %v298
  %v485 = vpop.f32.mrf.mxu0
  %v486 = vadd.f32 %v165, %v485
  %v487 = vpop.f32.mrf.mxu0
  %488 = vmatprep.mubr.f32.mxu0 0.0
  %489 = vmatmul.mubr.f32.gmra.mxu0 %v301
  %v490 = vpop.f32.mrf.mxu0
  %v491 = vadd.f32 %v170, %v490
  %v492 = vpop.f32.mrf.mxu0
  %493 = vmatprep.mubr.f32.mxu0 0.0
  %494 = vmatmul.mubr.f32.gmra.mxu0 %v304
  %v495 = vpop.f32.mrf.mxu0
  %v496 = vadd.f32 %v175, %v495
  %v497 = vpop.f32.mrf.mxu0
  %498 = vmatprep.mubr.f32.mxu0 0.0
  %499 = vmatmul.mubr.f32.gmra.mxu0 %v307
  %v500 = vpop.f32.mrf.mxu0
  %v501 = vadd.f32 %v180, %v500
  %v502 = vpop.f32.mrf.mxu0
  %503 = vmatprep.mubr.f32.mxu0 0.0
  %504 = vmatmul.mubr.f32.gmra.mxu0 %v310
  %v505 = vpop.f32.mrf.mxu0
  %v506 = vadd.f32 %v185, %v505
  %v507 = vpop.f32.mrf.mxu0
  %508 = vmatprep.mubr.f32.mxu0 0.0
  %509 = vmatmul.mubr.f32.gmra.mxu0 %v313
  %v510 = vpop.f32.mrf.mxu0
  %v511 = vadd.f32 %v190, %v510
  %v512 = vpop.f32.mrf.mxu0
  %513 = vmatprep.mubr.f32.mxu0 0.0
  %514 = vmatmul.mubr.f32.gmra.mxu0 %v316
  %v515 = vpop.f32.mrf.mxu0
  %v516 = vadd.f32 %v195, %v515
  %v517 = vpop.f32.mrf.mxu0
  %518 = vmatprep.mubr.f32.mxu0 0.0
  %519 = vmatmul.mubr.f32.gmra.mxu0 %v319
  %v520 = vpop.f32.mrf.mxu0
  %v521 = vadd.f32 %v200, %v520
  %v522 = vpop.f32.mrf.mxu0
  %523 = vmatprep.mubr.f32.mxu0 0.0
  %524 = vmatmul.mubr.f32.gmra.mxu0 %v322
  %v525 = vpop.f32.mrf.mxu0
  %v526 = vadd.f32 %v205, %v525
  %v527 = vpop.f32.mrf.mxu0
  %528 = vmatprep.mubr.f32.mxu0 0.0
  %529 = vmatmul.mubr.f32.gmra.mxu0 %v325
  %v530 = vpop.f32.mrf.mxu0
  %v531 = vadd.f32 %v210, %v530
  %v532 = vpop.f32.mrf.mxu0
  %533 = vmatprep.mubr.f32.mxu0 0.0
  %534 = vmatmul.mubr.f32.gmra.mxu0 %v328
  %v535 = vpop.f32.mrf.mxu0
  %v536 = vadd.f32 %v215, %v535
  %v537 = vpop.f32.mrf.mxu0
  %538 = vmatprep.mubr.f32.mxu0 0.0
  %539 = vmatmul.mubr.f32.gmra.mxu0 %v331
  %v540 = vpop.f32.mrf.mxu0
  %v541 = vadd.f32 %v220, %v540
  %v542 = vpop.f32.mrf.mxu0
  %543 = vmatprep.mubr.f32.mxu0 0.0
  %544 = vmatmul.mubr.f32.gmra.mxu0 %v334
  %v545 = vpop.f32.mrf.mxu0
  %v546 = vadd.f32 %v225, %v545
  %v547 = vpop.f32.mrf.mxu0
  %548 = vmatprep.mubr.f32.mxu0 0.0
  %549 = vmatmul.mubr.f32.gmra.mxu0 %v337
  %v550 = vpop.f32.mrf.mxu0
  %v551 = vadd.f32 %v230, %v550
  %v552 = vpop.f32.mrf.mxu0
  %553 = vmatprep.mubr.f32.mxu0 0.0
  %554 = vmatmul.mubr.f32.gmra.mxu0 %v340
  %v555 = vpop.f32.mrf.mxu0
  %v556 = vadd.f32 %v235, %v555
  %v557 = vpop.f32.mrf.mxu0
  %558 = vmatprep.mubr.f32.mxu0 0.0
  %559 = vmatmul.mubr.f32.gmra.mxu0 %v343
  %v560 = vpop.f32.mrf.mxu0
  %v561 = vadd.f32 %v240, %v560
  %v562 = vpop.f32.mrf.mxu0
  %563 = vmatprep.mubr.f32.mxu0 0.0
  %564 = vmatmul.mubr.f32.gmra.mxu0 %v346
  %v565 = vpop.f32.mrf.mxu0
  %v566 = vadd.f32 %v245, %v565
  %v567 = vpop.f32.mrf.mxu0
  %568 = vmatprep.mubr.f32.mxu0 0.0
  %569 = vmatmul.mubr.f32.gmra.mxu0 %v349
  %v570 = vpop.f32.mrf.mxu0
  %v571 = vadd.f32 %v250, %v570
  %v572 = vpop.f32.mrf.mxu0
  %573 = vmatprep.mubr.f32.mxu0 0.0
  %574 = vmatmul.mubr.f32.gmra.mxu0 %v352
  %v575 = vpop.f32.mrf.mxu0
  %v576 = vadd.f32 %v255, %v575
  %v577 = vpop.f32.mrf.mxu0
  %578 = vdwg.mxu0
  %v579 = vmax.f32 %v421, 0.0
  %v580 = vmax.f32 %v426, 0.0
  %v581 = vmax.f32 %v431, 0.0
  %v582 = vmax.f32 %v436, 0.0
  %v583 = vmax.f32 %v441, 0.0
  %v584 = vmax.f32 %v446, 0.0
  %v585 = vmax.f32 %v451, 0.0
  %v586 = vmax.f32 %v456, 0.0
  %v587 = vmax.f32 %v461, 0.0
  %v588 = vmax.f32 %v466, 0.0
  %v589 = vmax.f32 %v471, 0.0
  %v590 = vmax.f32 %v476, 0.0
  %v591 = vmax.f32 %v481, 0.0
  %v592 = vmax.f32 %v486, 0.0
  %v593 = vmax.f32 %v491, 0.0
  %v594 = vmax.f32 %v496, 0.0
  %v595 = vmax.f32 %v501, 0.0
  %v596 = vmax.f32 %v506, 0.0
  %v597 = vmax.f32 %v511, 0.0
  %v598 = vmax.f32 %v516, 0.0
  %v599 = vmax.f32 %v521, 0.0
  %v600 = vmax.f32 %v526, 0.0
  %v601 = vmax.f32 %v531, 0.0
  %v602 = vmax.f32 %v536, 0.0
  %v603 = vmax.f32 %v541, 0.0
  %v604 = vmax.f32 %v546, 0.0
  %v605 = vmax.f32 %v551, 0.0
  %v606 = vmax.f32 %v556, 0.0
  %v607 = vmax.f32 %v561, 0.0
  %v608 = vmax.f32 %v566, 0.0
  %v609 = vmax.f32 %v571, 0.0
  %v610 = vmax.f32 %v576, 0.0
  %v611 = vld [vmem:[%s3] sm:$0xff]
  %v612 = vld [vmem:[%s3 + $0x8] sm:$0xff]
  %v613 = vld [vmem:[%s3 + $0x10] sm:$0xff]
  %v614 = vld [vmem:[%s3 + $0x18] sm:$0xff]
  %v615 = vld [vmem:[%s3 + $0x20] sm:$0xff]
  %v616 = vld [vmem:[%s3 + $0x28] sm:$0xff]
  %v617 = vld [vmem:[%s3 + $0x30] sm:$0xff]
  %v618 = vld [vmem:[%s3 + $0x38] sm:$0xff]
  %v619 = vld [vmem:[%s3 + $0x40] sm:$0xff]
  %v620 = vld [vmem:[%s3 + $0x48] sm:$0xff]
  %v621 = vld [vmem:[%s3 + $0x50] sm:$0xff]
  %v622 = vld [vmem:[%s3 + $0x58] sm:$0xff]
  %v623 = vld [vmem:[%s3 + $0x60] sm:$0xff]
  %v624 = vld [vmem:[%s3 + $0x68] sm:$0xff]
  %v625 = vld [vmem:[%s3 + $0x70] sm:$0xff]
  %v626 = vld [vmem:[%s3 + $0x78] sm:$0xff]
  %v627 = vld [vmem:[%s3 + $0x80] sm:$0xff]
  %v628 = vld [vmem:[%s3 + $0x88] sm:$0xff]
  %v629 = vld [vmem:[%s3 + $0x90] sm:$0xff]
  %v630 = vld [vmem:[%s3 + $0x98] sm:$0xff]
  %v631 = vld [vmem:[%s3 + $0xa0] sm:$0xff]
  %v632 = vld [vmem:[%s3 + $0xa8] sm:$0xff]
  %v633 = vld [vmem:[%s3 + $0xb0] sm:$0xff]
  %v634 = vld [vmem:[%s3 + $0xb8] sm:$0xff]
  %v635 = vld [vmem:[%s3 + $0xc0] sm:$0xff]
  %v636 = vld [vmem:[%s3 + $0xc8] sm:$0xff]
  %v637 = vld [vmem:[%s3 + $0xd0] sm:$0xff]
  %v638 = vld [vmem:[%s3 + $0xd8] sm:$0xff]
  %v639 = vld [vmem:[%s3 + $0xe0] sm:$0xff]
  %v640 = vld [vmem:[%s3 + $0xe8] sm:$0xff]
  %v641 = vld [vmem:[%s3 + $0xf0] sm:$0xff]
  %v642 = vld [vmem:[%s3 + $0xf8] sm:$0xff]
  %v643 = vld [vmem:[%s4] sm:$0xff]
  %v644 = vld [vmem:[%s4 + $0x8] sm:$0xff]
  %v645 = vld [vmem:[%s4 + $0x10] sm:$0xff]
  %v646 = vld [vmem:[%s4 + $0x18] sm:$0xff]
  %v647 = vld [vmem:[%s4 + $0x20] sm:$0xff]
  %v648 = vld [vmem:[%s4 + $0x28] sm:$0xff]
  %v649 = vld [vmem:[%s4 + $0x30] sm:$0xff]
  %v650 = vld [vmem:[%s4 + $0x38] sm:$0xff]
  %v651 = vld [vmem:[%s4 + $0x40] sm:$0xff]
  %v652 = vld [vmem:[%s4 + $0x48] sm:$0xff]
  %v653 = vld [vmem:[%s4 + $0x50] sm:$0xff]
  %v654 = vld [vmem:[%s4 + $0x58] sm:$0xff]
  %v655 = vld [vmem:[%s4 + $0x60] sm:$0xff]
  %v656 = vld [vmem:[%s4 + $0x68] sm:$0xff]
  %v657 = vld [vmem:[%s4 + $0x70] sm:$0xff]
  %v658 = vld [vmem:[%s4 + $0x78] sm:$0xff]
  %660 = vset.pattern.permute.xlu0 0
  %661 = vperm.xlu0 %660, %v643
  %v662 = vpop.permute.xlu0 %661
  %665 = vset.pattern.permute.xlu0 0
  %666 = vperm.xlu0 %665, %v644
  %v667 = vpop.permute.xlu0 %666
  %670 = vset.pattern.permute.xlu0 0
  %671 = vperm.xlu0 %670, %v645
  %v672 = vpop.permute.xlu0 %671
  %675 = vset.pattern.permute.xlu0 0
  %676 = vperm.xlu0 %675, %v646
  %v677 = vpop.permute.xlu0 %676
  %680 = vset.pattern.permute.xlu0 0
  %681 = vperm.xlu0 %680, %v647
  %v682 = vpop.permute.xlu0 %681
  %685 = vset.pattern.permute.xlu0 0
  %686 = vperm.xlu0 %685, %v648
  %v687 = vpop.permute.xlu0 %686
  %690 = vset.pattern.permute.xlu0 0
  %691 = vperm.xlu0 %690, %v649
  %v692 = vpop.permute.xlu0 %691
  %695 = vset.pattern.permute.xlu0 0
  %696 = vperm.xlu0 %695, %v650
  %v697 = vpop.permute.xlu0 %696
  %700 = vset.pattern.permute.xlu0 0
  %701 = vperm.xlu0 %700, %v651
  %v702 = vpop.permute.xlu0 %701
  %705 = vset.pattern.permute.xlu0 0
  %706 = vperm.xlu0 %705, %v652
  %v707 = vpop.permute.xlu0 %706
  %710 = vset.pattern.permute.xlu0 0
  %711 = vperm.xlu0 %710, %v653
  %v712 = vpop.permute.xlu0 %711
  %715 = vset.pattern.permute.xlu0 0
  %716 = vperm.xlu0 %715, %v654
  %v717 = vpop.permute.xlu0 %716
  %720 = vset.pattern.permute.xlu0 0
  %721 = vperm.xlu0 %720, %v655
  %v722 = vpop.permute.xlu0 %721
  %725 = vset.pattern.permute.xlu0 0
  %726 = vperm.xlu0 %725, %v656
  %v727 = vpop.permute.xlu0 %726
  %730 = vset.pattern.permute.xlu0 0
  %731 = vperm.xlu0 %730, %v657
  %v732 = vpop.permute.xlu0 %731
  %735 = vset.pattern.permute.xlu0 0
  %736 = vperm.xlu0 %735, %v658
  %v737 = vpop.permute.xlu0 %736
  %739 = vmatprep.subr.mxu0 0.0
  %740 = vmatpush1.msra.mxu0 %v594
  %741 = vmatprep.subr.mxu0 0.0
  %742 = vmatpush1.msra.mxu0 %v593
  %743 = vmatprep.subr.mxu0 0.0
  %744 = vmatpush1.msra.mxu0 %v592
  %745 = vmatprep.subr.mxu0 0.0
  %746 = vmatpush1.msra.mxu0 %v591
  %747 = vmatprep.subr.mxu0 0.0
  %748 = vmatpush1.msra.mxu0 %v590
  %749 = vmatprep.subr.mxu0 0.0
  %750 = vmatpush1.msra.mxu0 %v589
  %751 = vmatprep.subr.mxu0 0.0
  %752 = vmatpush1.msra.mxu0 %v588
  %753 = vmatprep.subr.mxu0 0.0
  %754 = vmatpush1.msra.mxu0 %v587
  %755 = vmatprep.subr.mxu0 0.0
  %756 = vmatpush1.msra.mxu0 %v586
  %757 = vmatprep.subr.mxu0 0.0
  %758 = vmatpush1.msra.mxu0 %v585
  %759 = vmatprep.subr.mxu0 0.0
  %760 = vmatpush1.msra.mxu0 %v584
  %761 = vmatprep.subr.mxu0 0.0
  %762 = vmatpush1.msra.mxu0 %v583
  %763 = vmatprep.subr.mxu0 0.0
  %764 = vmatpush1.msra.mxu0 %v582
  %765 = vmatprep.subr.mxu0 0.0
  %766 = vmatpush1.msra.mxu0 %v581
  %767 = vmatprep.subr.mxu0 0.0
  %768 = vmatpush1.msra.mxu0 %v580
  %769 = vmatprep.subr.mxu0 0.0
  %770 = vmatpush1.msra.mxu0 %v579
  %771 = vmatprep.subr.mxu0 0.0
  %772 = vmatpush2.msra.mxu0 %v610
  %773 = vmatprep.subr.mxu0 0.0
  %774 = vmatpush2.msra.mxu0 %v609
  %775 = vmatprep.subr.mxu0 0.0
  %776 = vmatpush2.msra.mxu0 %v608
  %777 = vmatprep.subr.mxu0 0.0
  %778 = vmatpush2.msra.mxu0 %v607
  %779 = vmatprep.subr.mxu0 0.0
  %780 = vmatpush2.msra.mxu0 %v606
  %781 = vmatprep.subr.mxu0 0.0
  %782 = vmatpush2.msra.mxu0 %v605
  %783 = vmatprep.subr.mxu0 0.0
  %784 = vmatpush2.msra.mxu0 %v604
  %785 = vmatprep.subr.mxu0 0.0
  %786 = vmatpush2.msra.mxu0 %v603
  %787 = vmatprep.subr.mxu0 0.0
  %788 = vmatpush2.msra.mxu0 %v602
  %789 = vmatprep.subr.mxu0 0.0
  %790 = vmatpush2.msra.mxu0 %v601
  %791 = vmatprep.subr.mxu0 0.0
  %792 = vmatpush2.msra.mxu0 %v600
  %793 = vmatprep.subr.mxu0 0.0
  %794 = vmatpush2.msra.mxu0 %v599
  %795 = vmatprep.subr.mxu0 0.0
  %796 = vmatpush2.msra.mxu0 %v598
  %797 = vmatprep.subr.mxu0 0.0
  %798 = vmatpush2.msra.mxu0 %v597
  %799 = vmatprep.subr.mxu0 0.0
  %800 = vmatpush2.msra.mxu0 %v596
  %801 = vmatprep.subr.mxu0 0.0
  %802 = vmatpush2.msra.mxu0 %v595
  %803 = vmatprep.mubr.f32.mxu0 %v612
  %804 = vmatmul.mubr.f32.gmra.mxu0 %v611
  %v805 = vpop.f32.mrf.mxu0
  %v806 = vadd.f32 %v662, %v805
  %v807 = vpop.f32.mrf.mxu0
  %808 = vmatprep.mubr.f32.mxu0 %v614
  %809 = vmatmul.mubr.f32.gmra.mxu0 %v613
  %v810 = vpop.f32.mrf.mxu0
  %v811 = vadd.f32 %v667, %v810
  %v812 = vpop.f32.mrf.mxu0
  %813 = vmatprep.mubr.f32.mxu0 %v616
  %814 = vmatmul.mubr.f32.gmra.mxu0 %v615
  %v815 = vpop.f32.mrf.mxu0
  %v816 = vadd.f32 %v672, %v815
  %v817 = vpop.f32.mrf.mxu0
  %818 = vmatprep.mubr.f32.mxu0 %v618
  %819 = vmatmul.mubr.f32.gmra.mxu0 %v617
  %v820 = vpop.f32.mrf.mxu0
  %v821 = vadd.f32 %v677, %v820
  %v822 = vpop.f32.mrf.mxu0
  %823 = vmatprep.mubr.f32.mxu0 %v620
  %824 = vmatmul.mubr.f32.gmra.mxu0 %v619
  %v825 = vpop.f32.mrf.mxu0
  %v826 = vadd.f32 %v682, %v825
  %v827 = vpop.f32.mrf.mxu0
  %828 = vmatprep.mubr.f32.mxu0 %v622
  %829 = vmatmul.mubr.f32.gmra.mxu0 %v621
  %v830 = vpop.f32.mrf.mxu0
  %v831 = vadd.f32 %v687, %v830
  %v832 = vpop.f32.mrf.mxu0
  %833 = vmatprep.mubr.f32.mxu0 %v624
  %834 = vmatmul.mubr.f32.gmra.mxu0 %v623
  %v835 = vpop.f32.mrf.mxu0
  %v836 = vadd.f32 %v692, %v835
  %v837 = vpop.f32.mrf.mxu0
  %838 = vmatprep.mubr.f32.mxu0 %v626
  %839 = vmatmul.mubr.f32.gmra.mxu0 %v625
  %v840 = vpop.f32.mrf.mxu0
  %v841 = vadd.f32 %v697, %v840
  %v842 = vpop.f32.mrf.mxu0
  %843 = vmatprep.mubr.f32.mxu0 %v628
  %844 = vmatmul.mubr.f32.gmra.mxu0 %v627
  %v845 = vpop.f32.mrf.mxu0
  %v846 = vadd.f32 %v702, %v845
  %v847 = vpop.f32.mrf.mxu0
  %848 = vmatprep.mubr.f32.mxu0 %v630
  %849 = vmatmul.mubr.f32.gmra.mxu0 %v629
  %v850 = vpop.f32.mrf.mxu0
  %v851 = vadd.f32 %v707, %v850
  %v852 = vpop.f32.mrf.mxu0
  %853 = vmatprep.mubr.f32.mxu0 %v632
  %854 = vmatmul.mubr.f32.gmra.mxu0 %v631
  %v855 = vpop.f32.mrf.mxu0
  %v856 = vadd.f32 %v712, %v855
  %v857 = vpop.f32.mrf.mxu0
  %858 = vmatprep.mubr.f32.mxu0 %v634
  %859 = vmatmul.mubr.f32.gmra.mxu0 %v633
  %v860 = vpop.f32.mrf.mxu0
  %v861 = vadd.f32 %v717, %v860
  %v862 = vpop.f32.mrf.mxu0
  %863 = vmatprep.mubr.f32.mxu0 %v636
  %864 = vmatmul.mubr.f32.gmra.mxu0 %v635
  %v865 = vpop.f32.mrf.mxu0
  %v866 = vadd.f32 %v722, %v865
  %v867 = vpop.f32.mrf.mxu0
  %868 = vmatprep.mubr.f32.mxu0 %v638
  %869 = vmatmul.mubr.f32.gmra.mxu0 %v637
  %v870 = vpop.f32.mrf.mxu0
  %v871 = vadd.f32 %v727, %v870
  %v872 = vpop.f32.mrf.mxu0
  %873 = vmatprep.mubr.f32.mxu0 %v640
  %874 = vmatmul.mubr.f32.gmra.mxu0 %v639
  %v875 = vpop.f32.mrf.mxu0
  %v876 = vadd.f32 %v732, %v875
  %v877 = vpop.f32.mrf.mxu0
  %878 = vmatprep.mubr.f32.mxu0 %v642
  %879 = vmatmul.mubr.f32.gmra.mxu0 %v641
  %v880 = vpop.f32.mrf.mxu0
  %v881 = vadd.f32 %v737, %v880
  %v882 = vpop.f32.mrf.mxu0
  %883 = vdwg.mxu0
  %v884 = vmax.f32 %v806, 0.0
  %v885 = vmax.f32 %v811, 0.0
  %v886 = vmax.f32 %v816, 0.0
  %v887 = vmax.f32 %v821, 0.0
  %v888 = vmax.f32 %v826, 0.0
  %v889 = vmax.f32 %v831, 0.0
  %v890 = vmax.f32 %v836, 0.0
  %v891 = vmax.f32 %v841, 0.0
  %v892 = vmax.f32 %v846, 0.0
  %v893 = vmax.f32 %v851, 0.0
  %v894 = vmax.f32 %v856, 0.0
  %v895 = vmax.f32 %v861, 0.0
  %v896 = vmax.f32 %v866, 0.0
  %v897 = vmax.f32 %v871, 0.0
  %v898 = vmax.f32 %v876, 0.0
  %v899 = vmax.f32 %v881, 0.0
  %v900 = vld [vmem:[%s5] sm:$0xff]
  %v901 = vld [vmem:[%s6] sm:$0xff]
  %903 = vset.pattern.permute.xlu0 0
  %904 = vperm.xlu0 %903, %v901
  %v905 = vpop.permute.xlu0 %904
  %907 = vmatprep.subr.mxu0 0.0
  %908 = vmatpush1.msra.mxu0 %v899
  %909 = vmatprep.subr.mxu0 0.0
  %910 = vmatpush1.msra.mxu0 %v898
  %911 = vmatprep.subr.mxu0 0.0
  %912 = vmatpush1.msra.mxu0 %v897
  %913 = vmatprep.subr.mxu0 0.0
  %914 = vmatpush1.msra.mxu0 %v896
  %915 = vmatprep.subr.mxu0 0.0
  %916 = vmatpush1.msra.mxu0 %v895
  %917 = vmatprep.subr.mxu0 0.0
  %918 = vmatpush1.msra.mxu0 %v894
  %919 = vmatprep.subr.mxu0 0.0
  %920 = vmatpush1.msra.mxu0 %v893
  %921 = vmatprep.subr.mxu0 0.0
  %922 = vmatpush1.msra.mxu0 %v892
  %923 = vmatprep.subr.mxu0 0.0
  %924 = vmatpush1.msra.mxu0 %v891
  %925 = vmatprep.subr.mxu0 0.0
  %926 = vmatpush1.msra.mxu0 %v890
  %927 = vmatprep.subr.mxu0 0.0
  %928 = vmatpush1.msra.mxu0 %v889
  %929 = vmatprep.subr.mxu0 0.0
  %930 = vmatpush1.msra.mxu0 %v888
  %931 = vmatprep.subr.mxu0 0.0
  %932 = vmatpush1.msra.mxu0 %v887
  %933 = vmatprep.subr.mxu0 0.0
  %934 = vmatpush1.msra.mxu0 %v886
  %935 = vmatprep.subr.mxu0 0.0
  %936 = vmatpush1.msra.mxu0 %v885
  %937 = vmatprep.subr.mxu0 0.0
  %938 = vmatpush1.msra.mxu0 %v884
  %939 = vmatprep.subr.mxu0 0.0
  %940 = vmatpush2.msra.mxu0 0.0
  %941 = vmatprep.subr.mxu0 0.0
  %942 = vmatpush2.msra.mxu0 0.0
  %943 = vmatprep.subr.mxu0 0.0
  %944 = vmatpush2.msra.mxu0 0.0
  %945 = vmatprep.subr.mxu0 0.0
  %946 = vmatpush2.msra.mxu0 0.0
  %947 = vmatprep.subr.mxu0 0.0
  %948 = vmatpush2.msra.mxu0 0.0
  %949 = vmatprep.subr.mxu0 0.0
  %950 = vmatpush2.msra.mxu0 0.0
  %951 = vmatprep.subr.mxu0 0.0
  %952 = vmatpush2.msra.mxu0 0.0
  %953 = vmatprep.subr.mxu0 0.0
  %954 = vmatpush2.msra.mxu0 0.0
  %955 = vmatprep.subr.mxu0 0.0
  %956 = vmatpush2.msra.mxu0 0.0
  %957 = vmatprep.subr.mxu0 0.0
  %958 = vmatpush2.msra.mxu0 0.0
  %959 = vmatprep.subr.mxu0 0.0
  %960 = vmatpush2.msra.mxu0 0.0
  %961 = vmatprep.subr.mxu0 0.0
  %962 = vmatpush2.msra.mxu0 0.0
  %963 = vmatprep.subr.mxu0 0.0
  %964 = vmatpush2.msra.mxu0 0.0
  %965 = vmatprep.subr.mxu0 0.0
  %966 = vmatpush2.msra.mxu0 0.0
  %967 = vmatprep.subr.mxu0 0.0
  %968 = vmatpush2.msra.mxu0 0.0
  %969 = vmatprep.subr.mxu0 0.0
  %970 = vmatpush2.msra.mxu0 0.0
  %971 = vmatprep.mubr.f32.mxu0 0.0
  %972 = vmatmul.mubr.f32.gmra.mxu0 %v900
  %v973 = vpop.f32.mrf.mxu0
  %v974 = vadd.f32 %v905, %v973
  %v975 = vpop.f32.mrf.mxu0
  %976 = vdwg.mxu0
  %v977 = vld [vmem:[%s7] sm:$0xff]
  %979 = vset.pattern.permute.xlu0 0
  %980 = vperm.xlu0 %979, %v977
  %v981 = vpop.permute.xlu0 %980
  %v983 = vmax.f32 %v974, %v981
  %v984 = vld [vmem:[%s8] sm:$0xff]
  %986 = vset.pattern.permute.xlu0 0
  %987 = vperm.xlu0 %986, %v984
  %v988 = vpop.permute.xlu0 %987
  %v990 = vmin.f32 %v983, %v988
  %vm991 = vcmask 15360
  %992 = vst.msk [vmem:[%s9] sm:$0xff] %vm991, %v990
  // Predicated region
  $region38: #{actor_net_forward.1} parent=0 // pred_check
    _
  $region39: #{actor_net_forward.1} parent=0 // pred_check_branch
    %994 = sbr.rel (0) target = $region41
  $region40: #{actor_net_forward.1} parent=0 // pred_region
    _
  $region41: #{actor_net_forward.1} parent=0 // pred_fallthru
    _
  // Predicated region
  $region42: #{actor_net_forward.1} parent=0 // pred_check
    _
  $region43: #{actor_net_forward.1} parent=0 // pred_check_branch
    %996 = sbr.rel (0) target = $region45
  $region44: #{actor_net_forward.1} parent=0 // pred_region
    _
  $region45: #{actor_net_forward.1} parent=0 // pred_fallthru
    _

</llo_original>
